<compile_context>
chip_gen: v5e
topology: v5e:2x2
jax: 0.10.0
libtpu: 0.0.40
codegen_flags: <defaults>
</compile_context>

<pallas_src>
import functools

import jax
import jax.numpy as jnp
from jax.experimental import pallas as pl
from jax.experimental.pallas import tpu as pltpu


# -----------------------------------------------------------------------------
# Fused kernel: residual mix (stand-in decoder layers), then LayerNorm.
# -----------------------------------------------------------------------------
def _fused_decoder_kernel(x_ref, enc_ref, o_ref, *, total_scale, alpha, beta,
                          eps):
    x = x_ref[...].astype(jnp.float32)          # (block_r, D)
    enc = enc_ref[...].astype(jnp.float32)      # (block_r, D)

    # Stand-in residual layers, folded into one constant in the wrapper.
    # TODO(synk): replace with real DecoderBlock math once its definition
    # exists.
    x = x + total_scale * enc

    d_model = x.shape[-1]
    # Mean (one cross-lane reduce), reused for the centered variance.
    mean = jnp.sum(x, axis=-1, keepdims=True) * (1.0 / d_model)
    centered = x - mean
    # torch.Tensor.std default: unbiased estimator (divide by N-1).
    # Guard the degenerate d_model == 1 case against a division by zero
    # (PyTorch would produce NaN there; here it degrades to biased form).
    unbiased_div = 1.0 / max(d_model - 1, 1)
    var = jnp.sum(centered * centered, axis=-1, keepdims=True) * unbiased_div
    std = jnp.sqrt(var)
    # Per-row scalar: alpha / (std + eps). Exact reciprocal keeps the 1e-5
    # tolerance vs the reference (approx=True could exceed it).
    inv = alpha * pl.reciprocal(std + eps, approx=False)    # (block_r, 1)
    o_ref[...] = (centered * inv + beta).astype(o_ref.dtype)


def _vmem_capacity_bytes():
    """Physical VMEM of the current chip; conservative fallback if unknown."""
    try:
        return int(pltpu.get_tpu_info().vmem_capacity_bytes)
    except Exception:
        return 64 * 1024 * 1024  # v7x-class (smallest) assumption


def fused_decoder_forward(
    x,
    encoder_output,
    *,
    scales,
    alpha,
    beta,
    eps=1e-6,
    max_block_rows=4096,
):
    """x, encoder_output: [B, S, D]. Returns LayerNorm(residual-mixed x)."""
    b, s_len, d = x.shape
    rows = b * s_len
    x2d = x.reshape(rows, d)
    e2d = encoder_output.reshape(rows, d)

    # ---- Hardware-derived VMEM budget ---------------------------------------
    # v6e/v5e: 128 MiB physical -> ~42 MiB working budget.
    # v7x:      64 MiB physical -> ~21 MiB working budget (keeps both TCs'
    #           tiles + double buffers well under the 64 MiB cap).
    vmem_capacity = _vmem_capacity_bytes()
    vmem_budget_bytes = min(vmem_capacity // 3, 48 * 1024 * 1024)
    vmem_limit_bytes = min(int(0.75 * vmem_capacity), 96 * 1024 * 1024)

    # ---- Row tile sizing ----------------------------------------------------
    # Per row of a block we hold (double-buffered) the two input tiles and the
    # output tile, plus ~3 block-sized f32 intermediates created in-kernel
    # (x_f32, enc_f32, centered).
    in_size = jnp.dtype(x.dtype).itemsize
    out_size = in_size
    bytes_per_row = d * (2 * in_size * 2 + out_size * 2 + 3 * 4)

    align = 8 if in_size >= 4 else 16  # sub-32-bit dtypes pack 2 rows/sublane
    block_r = min(max_block_rows, max(align, vmem_budget_bytes // bytes_per_row))
    block_r = max(align, (block_r // align) * align)

    rows_aligned = ((rows + align - 1) // align) * align
    block_r = min(block_r, rows_aligned)

    # Ensure >= 2 grid steps when rows allow, so the "parallel" axis shards
    # across both TensorCores on v7x (near-zero cost elsewhere: one extra
    # ~0.35 us grid step).
    half_rows = ((rows_aligned // 2) // align) * align
    if half_rows >= align:
        block_r = min(block_r, half_rows)

    if rows <= align:
        # Tiny inputs: a full-extent block (equal to the array dim) is always
        # legal and avoids an oversized boundary block.
        block_r = rows

    n_blocks = pl.cdiv(rows, block_r)

    kernel = functools.partial(
        _fused_decoder_kernel,
        # Folding the per-layer scales changes rounding vs sequential adds by
        # << 1e-5; noted per review.
        total_scale=float(sum(float(s) for s in scales)),
        alpha=float(alpha),
        beta=float(beta),
        eps=float(eps),
    )

    out2d = pl.pallas_call(
        kernel,
        out_shape=jax.ShapeDtypeStruct((rows, d), x.dtype),
        grid_spec=pltpu.PrefetchScalarGridSpec(
            num_scalar_prefetch=0,
            grid=(n_blocks,),
            in_specs=[
                pl.BlockSpec((block_r, d), lambda i: (i, 0)),  # x rows
                pl.BlockSpec((block_r, d), lambda i: (i, 0)),  # enc rows
            ],
            out_specs=pl.BlockSpec((block_r, d), lambda i: (i, 0)),
        ),
        compiler_params=pltpu.CompilerParams(
            dimension_semantics=("parallel",),
            vmem_limit_bytes=vmem_limit_bytes,
        ),
    )(x2d, e2d)

    return out2d.reshape(b, s_len, d)


# -----------------------------------------------------------------------------
# Decoder wrapper mirroring the PyTorch module.
# -----------------------------------------------------------------------------
class StandinResidualLayer:
    """Stand-in for the (opaque) DecoderBlock: x <- x + scale * encoder_out."""

    def __init__(self, scale):
        self.scale = float(scale)


class Decoder:
    def __init__(self, layers, eps=1e-6):
        self.layers = layers
        self.eps = eps
        # nn.Parameter(torch.ones(1)) / nn.Parameter(torch.zeros(1)).
        self.alpha = 1.0
        self.beta = 0.0

    def __call__(self, x, encoder_output, src_mask, tgt_mask):
        # All stand-in layers are residual mixes with encoder_output; fuse
        # them with the final LayerNorm into a single kernel launch.
        # TODO(synk): real DecoderBlock layers would need their own kernels
        # (attention / FFN) chained before the norm.
        scales = [layer.scale for layer in self.layers]
        del src_mask, tgt_mask  # unused by the stand-in layers
        return fused_decoder_forward(
            x,
            encoder_output,
            scales=scales,
            alpha=self.alpha,
            beta=self.beta,
            eps=self.eps,
        )


if __name__ == "__main__":
    key = jax.random.PRNGKey(0)
    k_x, k_enc = jax.random.split(key)

    B, S, D = 2, 8, 32
    x = jax.random.normal(k_x, (B, S, D), dtype=jnp.float32)
    encoder_output = jax.random.normal(k_enc, (B, S, D), dtype=jnp.float32)
    src_mask = jnp.ones((B, 1, 1, S), dtype=jnp.float32)
    tgt_mask = jnp.tril(jnp.ones((S, S), dtype=jnp.float32))[None, None]

    decoder = Decoder(
        layers=[StandinResidualLayer(0.1), StandinResidualLayer(0.2)]
    )

    out = decoder(x, encoder_output, src_mask, tgt_mask)
    out = jax.block_until_ready(out)

    # Pure-JAX reference of the same forward (sequential residual mixes, then
    # PyTorch-style LayerNorm with unbiased std and eps on the std).
    x_ref = x + 0.1 * encoder_output
    x_ref = x_ref + 0.2 * encoder_output
    mean = jnp.mean(x_ref, axis=-1, keepdims=True)
    std = jnp.sqrt(
        jnp.sum((x_ref - mean) ** 2, axis=-1, keepdims=True) / (D - 1)
    )
    ref = 1.0 * (x_ref - mean) / (std + 1e-6) + 0.0
    assert jnp.allclose(out, ref, atol=1e-5, rtol=1e-5), "mismatch vs reference"

    print("KERNEL_OK")
</pallas_src>

<mosaic_0001>
module attributes {stable_mosaic.version = 11 : i64} {
  func.func @_fused_decoder_kernel(%arg0: i32, %arg1: memref<8x32xf32, #tpu.memory_space<vmem>>, %arg2: memref<8x32xf32, #tpu.memory_space<vmem>>, %arg3: memref<8x32xf32, #tpu.memory_space<vmem>>) attributes {dimension_semantics = [#tpu.dimension_semantics<parallel>], iteration_bounds = array<i64: 2>, scalar_prefetch = 0 : i64, scratch_operands = 0 : i64, tpu.core_type = #tpu.core_type<tc>, window_params = [{transform_indices = @transform_0, window_bounds = array<i64: 8, 32>}, {transform_indices = @transform_1, window_bounds = array<i64: 8, 32>}, {transform_indices = @transform_2, window_bounds = array<i64: 8, 32>}]} {
    %c0 = arith.constant 0 : index
    %c0_0 = arith.constant 0 : index
    %0 = vector.load %arg1[%c0, %c0_0] : memref<8x32xf32, #tpu.memory_space<vmem>>, vector<8x32xf32>
    %c0_1 = arith.constant 0 : index
    %c0_2 = arith.constant 0 : index
    %1 = vector.load %arg2[%c0_1, %c0_2] : memref<8x32xf32, #tpu.memory_space<vmem>>, vector<8x32xf32>
    %cst = arith.constant 3.000000e-01 : f32
    %2 = vector.broadcast %cst : f32 to vector<8x32xf32>
    %3 = arith.mulf %2, %1 : vector<8x32xf32>
    %4 = arith.addf %0, %3 : vector<8x32xf32>
    %cst_3 = arith.constant dense<0.000000e+00> : vector<8xf32>
    %5 = vector.multi_reduction <add>, %4, %cst_3 [1] : vector<8x32xf32> to vector<8xf32>
    %6 = vector.shape_cast %5 : vector<8xf32> to vector<8x1xf32>
    %cst_4 = arith.constant 3.125000e-02 : f32
    %7 = vector.broadcast %cst_4 : f32 to vector<8x1xf32>
    %8 = arith.mulf %6, %7 : vector<8x1xf32>
    %9 = vector.broadcast %8 : vector<8x1xf32> to vector<8x32xf32>
    %10 = arith.subf %4, %9 : vector<8x32xf32>
    %11 = arith.mulf %10, %10 : vector<8x32xf32>
    %cst_5 = arith.constant dense<0.000000e+00> : vector<8xf32>
    %12 = vector.multi_reduction <add>, %11, %cst_5 [1] : vector<8x32xf32> to vector<8xf32>
    %13 = vector.shape_cast %12 : vector<8xf32> to vector<8x1xf32>
    %cst_6 = arith.constant 0.0322580636 : f32
    %14 = vector.broadcast %cst_6 : f32 to vector<8x1xf32>
    %15 = arith.mulf %13, %14 : vector<8x1xf32>
    %16 = math.sqrt %15 : vector<8x1xf32>
    %cst_7 = arith.constant 9.99999997E-7 : f32
    %17 = vector.broadcast %cst_7 : f32 to vector<8x1xf32>
    %18 = arith.addf %16, %17 : vector<8x1xf32>
    %19 = tpu.reciprocal %18 : vector<8x1xf32> -> vector<8x1xf32>
    %cst_8 = arith.constant 1.000000e+00 : f32
    %20 = vector.broadcast %cst_8 : f32 to vector<8x1xf32>
    %21 = arith.mulf %20, %19 : vector<8x1xf32>
    %22 = vector.broadcast %21 : vector<8x1xf32> to vector<8x32xf32>
    %23 = arith.mulf %10, %22 : vector<8x32xf32>
    %cst_9 = arith.constant 0.000000e+00 : f32
    %24 = vector.broadcast %cst_9 : f32 to vector<8x32xf32>
    %25 = arith.addf %23, %24 : vector<8x32xf32>
    %c0_10 = arith.constant 0 : index
    %c0_11 = arith.constant 0 : index
    %26 = vector.load %arg3[%c0_10, %c0_11] : memref<8x32xf32, #tpu.memory_space<vmem>>, vector<8x32xf32>
    tpu.vector_store %arg3[%c0_10, %c0_11], %25 {strides = array<i32>} : memref<8x32xf32, #tpu.memory_space<vmem>>, vector<8x32xf32>,
    return
  }
  func.func @transform_0(%arg0: i32) -> (i32, i32) {
    %c0_i32 = arith.constant 0 : i32
    %c0_i32_0 = arith.constant 0 : i32
    return %arg0, %c0_i32 : i32, i32
  }
  func.func @transform_1(%arg0: i32) -> (i32, i32) {
    %c0_i32 = arith.constant 0 : i32
    %c0_i32_0 = arith.constant 0 : i32
    return %arg0, %c0_i32 : i32, i32
  }
  func.func @transform_2(%arg0: i32) -> (i32, i32) {
    %c0_i32 = arith.constant 0 : i32
    %c0_i32_0 = arith.constant 0 : i32
    return %arg0, %c0_i32 : i32, i32
  }
}

</mosaic_0001>

<llo_original>
// kernel: tpu_custom_call.1
$region0: #{tpu_custom_call.1}
  #allocation0 [shape = 'u32[]', space=smem, size = 0x4, offset = 0x4, fixed_abs, tag = 'smem constant byte address 0x4 - core index']
  #allocation1 [shape = 'u32[72,128]{1,0:T(1,128)}', space=vmem, size = 0x9000, scoped, tag = 'internal scratch']
  %s0 = inlined_call_operand.hbm [shape: f32[16,32], index: 0, kind: input, shape index: {}]
  %s1 = inlined_call_operand.hbm [shape: f32[16,32], index: 1, kind: input, shape index: {}]
  %s2 = inlined_call_operand.hbm [shape: f32[16,32], index: 2, kind: output, shape index: {}]
  %s3 = sld [smem:[#allocation0]]
  $region49: #{tpu_custom_call.1} parent=0
    _
  %s5 = ssub.s32 1, %s3
  %s6 = scalar_select 0, %s5, %s3
  $region1: #{tpu_custom_call.1} parent=0
    #allocation2 [shape = 'u8[8192]{0}', space=vmem, size = 0x2000, scoped, tag = 'input window, operand 0']
    #allocation3 [shape = 's32[2]{0}', space=sflag, size = 0x8, scoped, tag = 'scoped memory for tpu_custom_call.1']
    #allocation4 [shape = 's32[2]{0}', space=sflag, size = 0x8, scoped, tag = 'scoped memory for tpu_custom_call.1']
    #allocation5 [shape = 'u8[8192]{0}', space=vmem, size = 0x2000, scoped, tag = 'input window, operand 1']
    #allocation6 [shape = 's32[2]{0}', space=sflag, size = 0x8, scoped, tag = 'scoped memory for tpu_custom_call.1']
    #allocation7 [shape = 'u8[8192]{0}', space=vmem, size = 0x2000, scoped, tag = 'output window, operand 0']
    %7 = vsyncpa [#allocation3], 0
    %s8 = scalar_lea.sflag [#allocation3], 1
    %9 = vsyncpa %s8, 0
    %10 = vsyncpa [#allocation6], 0
    %s11 = scalar_lea.sflag [#allocation6], 1
    %12 = vsyncpa %s11, 0
    %13 = vsyncpa [#allocation4], 0
    %s14 = scalar_lea.sflag [#allocation4], 1
    %15 = vsyncpa %s14, 0
    loop: start=0, step=1, limit=4
    $region2: #{tpu_custom_call.1} parent=1 // loop_pre_header
      _
    $region3: #{tpu_custom_call.1} parent=1 // loop_header
      %s17 = sphi 0, %s21
      %p18 = scmp.ge.s32.totalorder %s17, 4
      %s27 = sphi 0, %s29
      %s30 = sphi 0, %s27
      %s31 = sphi 0, %s30
      %s47 = sphi 0, %s31
      %s53 = sphi 0, %s55
      %s56 = sphi 0, %s53
      %s57 = sphi 0, %s56
      %s73 = sphi 0, %s57
      %s79 = sphi 0, %s81
      %s82 = sphi 0, %s79
      %s83 = sphi 0, %s82
      %s99 = sphi 0, %s83
    $region4: #{tpu_custom_call.1} parent=1 // loop_header_branch
      %20 = sbr.rel (%p18) target = $region8
    $region5: #{tpu_custom_call.1} parent=1 // loop_body
      %s22 = ssub.s32 %s17, 1
      %s23 = ssub.s32 %s17, 2
      %s24 = sadd.s32 %s17, 1
      %s25 = ssub.s32 %s17, %s24
      %p26 = scmp.eq.s32.totalorder %s25, 0
      %s28 = sadd.s32 %s27, 1
      %s29 = scalar_select %p26, %s27, %s28
      %p32 = pneg %p26
      %p33 = scmp.eq.s32.totalorder %s17, 1
      %p34 = por %p32, %p33
      %p35 = scmp.ne.s32.totalorder %s27, %s30
      %p36 = scmp.eq.s32.totalorder %s17, 0
      %p37 = por %p35, %p36
      %p38 = scmp.ne.s32.totalorder %s27, %s30
      %p39 = scmp.eq.s32.totalorder %s22, 1
      %p40 = por %p38, %p39
      %p41 = scmp.ne.s32.totalorder %s30, %s31
      %p42 = scmp.eq.s32.totalorder %s22, 0
      %p43 = por %p41, %p42
      %p44 = scmp.ne.s32.totalorder %s30, %s31
      %p45 = scmp.eq.s32.totalorder %s23, 1
      %p46 = por %p44, %p45
      %p48 = scmp.ne.s32.totalorder %s31, %s47
      %p49 = scmp.eq.s32.totalorder %s23, 0
      %p50 = por %p48, %p49
      %s51 = ssub.s32 %s17, %s24
      %p52 = scmp.eq.s32.totalorder %s51, 0
      %s54 = sadd.s32 %s53, 1
      %s55 = scalar_select %p52, %s53, %s54
      %p58 = pneg %p52
      %p59 = scmp.eq.s32.totalorder %s17, 1
      %p60 = por %p58, %p59
      %p61 = scmp.ne.s32.totalorder %s53, %s56
      %p62 = scmp.eq.s32.totalorder %s17, 0
      %p63 = por %p61, %p62
      %p64 = scmp.ne.s32.totalorder %s53, %s56
      %p65 = scmp.eq.s32.totalorder %s22, 1
      %p66 = por %p64, %p65
      %p67 = scmp.ne.s32.totalorder %s56, %s57
      %p68 = scmp.eq.s32.totalorder %s22, 0
      %p69 = por %p67, %p68
      %p70 = scmp.ne.s32.totalorder %s56, %s57
      %p71 = scmp.eq.s32.totalorder %s23, 1
      %p72 = por %p70, %p71
      %p74 = scmp.ne.s32.totalorder %s57, %s73
      %p75 = scmp.eq.s32.totalorder %s23, 0
      %p76 = por %p74, %p75
      %s77 = ssub.s32 %s17, %s24
      %p78 = scmp.eq.s32.totalorder %s77, 0
      %s80 = sadd.s32 %s79, 1
      %s81 = scalar_select %p78, %s79, %s80
      %p84 = pneg %p78
      %p85 = scmp.eq.s32.totalorder %s17, 1
      %p86 = por %p84, %p85
      %p87 = scmp.ne.s32.totalorder %s79, %s82
      %p88 = scmp.eq.s32.totalorder %s17, 0
      %p89 = por %p87, %p88
      %p90 = scmp.ne.s32.totalorder %s79, %s82
      %p91 = scmp.eq.s32.totalorder %s22, 1
      %p92 = por %p90, %p91
      %p93 = scmp.ne.s32.totalorder %s82, %s83
      %p94 = scmp.eq.s32.totalorder %s22, 0
      %p95 = por %p93, %p94
      %p96 = scmp.ne.s32.totalorder %s82, %s83
      %p97 = scmp.eq.s32.totalorder %s23, 1
      %p98 = por %p96, %p97
      %p100 = scmp.ne.s32.totalorder %s83, %s99
      %p101 = scmp.eq.s32.totalorder %s23, 0
      %p102 = por %p100, %p101
      %p103 = scmp.le.s32.totalorder 1, %s17
      %p104 = scmp.lt.s32.totalorder %s17, 3
      %p105 = pnand %p103, %p104
      %p106 = pneg %p105
      // Predicated region
      $region9: #{tpu_custom_call.1} parent=5 // pred_check
        _
      $region10: #{tpu_custom_call.1} parent=5 // pred_check_branch
        %108 = sbr.rel (%p105) target = $region12
      $region11: #{tpu_custom_call.1} parent=5 // pred_region
        %s109 = ssub.s32 %s17, 1
      $region12: #{tpu_custom_call.1} parent=5 // pred_fallthru
        _
      %p110 = scmp.lt.s32.totalorder %s17, 2
      // Predicated region
      $region13: #{tpu_custom_call.1} parent=5 // pred_check
        %p111 = pneg %p110
      $region14: #{tpu_custom_call.1} parent=5 // pred_check_branch
        %113 = sbr.rel (%p111) target = $region16
      $region15: #{tpu_custom_call.1} parent=5 // pred_region
        // Predicated region
        $region17: #{tpu_custom_call.1} parent=15 // pred_check
          %p114 = pneg %p37
        $region18: #{tpu_custom_call.1} parent=15 // pred_check_branch
          %116 = sbr.rel (%p114) target = $region20
        $region19: #{tpu_custom_call.1} parent=15 // pred_region
          %s117 = sand.u32 %s27, 1
          %s118 = scalar_lea.sflag [#allocation3], %s117
          %s119 = sand.u32 %s27, 1
          %s120 = smul.addr %s119, 8
          %s121 = scalar_lea.vmem [#allocation2], %s120
          %123 = vsyncadd %s118, 0
          %s124 = smul.addr %s17, 8
          %s125 = scalar_lea.hbm %s0, %s124
          %s127 = sshll.u32 %s125, 4
          %s128 = int_to_ptr.hbm [resolvable:$true] %s127
          %s129 = sshll.u32 %s121, 4
          %s130 = int_to_ptr.vmem [resolvable:$true] %s129
          %132 = dma.hbm_to_vmem [thread:$0]  %s128, 128, %s130, %s118
        $region20: #{tpu_custom_call.1} parent=15 // pred_fallthru
          _
        // Predicated region
        $region21: #{tpu_custom_call.1} parent=15 // pred_check
          %p133 = pneg %p63
        $region22: #{tpu_custom_call.1} parent=15 // pred_check_branch
          %135 = sbr.rel (%p133) target = $region24
        $region23: #{tpu_custom_call.1} parent=15 // pred_region
          %s136 = sand.u32 %s53, 1
          %s137 = scalar_lea.sflag [#allocation6], %s136
          %s138 = sand.u32 %s53, 1
          %s139 = smul.addr %s138, 8
          %s140 = scalar_lea.vmem [#allocation5], %s139
          %142 = vsyncadd %s137, 0
          %s143 = smul.addr %s17, 8
          %s144 = scalar_lea.hbm %s1, %s143
          %s146 = sshll.u32 %s144, 4
          %s147 = int_to_ptr.hbm [resolvable:$true] %s146
          %s148 = sshll.u32 %s140, 4
          %s149 = int_to_ptr.vmem [resolvable:$true] %s148
          %151 = dma.hbm_to_vmem [thread:$0]  %s147, 128, %s149, %s137
        $region24: #{tpu_custom_call.1} parent=15 // pred_fallthru
          _
      $region16: #{tpu_custom_call.1} parent=5 // pred_fallthru
        _
      %p152 = scmp.le.s32.totalorder 1, %s17
      %p153 = scmp.lt.s32.totalorder %s17, 3
      %p154 = pnand %p152, %p153
      %p155 = pneg %p154
      // Predicated region
      $region25: #{tpu_custom_call.1} parent=5 // pred_check
        _
      $region26: #{tpu_custom_call.1} parent=5 // pred_check_branch
        %157 = sbr.rel (%p154) target = $region28
      $region27: #{tpu_custom_call.1} parent=5 // pred_region
        %s158 = ssub.s32 %s17, 1
        %s159 = sand.u32 %s30, 1
        %s160 = scalar_lea.sflag [#allocation3], %s159
        %s161 = sand.u32 %s30, 1
        %s162 = smul.addr %s161, 8
        %s163 = scalar_lea.vmem [#allocation2], %s162
        // Predicated region
        $region29: #{tpu_custom_call.1} parent=27 // pred_check
          %p164 = pneg %p43
        $region30: #{tpu_custom_call.1} parent=27 // pred_check_branch
          %166 = sbr.rel (%p164) target = $region32
        $region31: #{tpu_custom_call.1} parent=27 // pred_region
          %168 = dma.done %s160, 128
        $region32: #{tpu_custom_call.1} parent=27 // pred_fallthru
          _
        %s169 = sand.u32 %s56, 1
        %s170 = scalar_lea.sflag [#allocation6], %s169
        %s171 = sand.u32 %s56, 1
        %s172 = smul.addr %s171, 8
        %s173 = scalar_lea.vmem [#allocation5], %s172
        // Predicated region
        $region33: #{tpu_custom_call.1} parent=27 // pred_check
          %p174 = pneg %p69
        $region34: #{tpu_custom_call.1} parent=27 // pred_check_branch
          %176 = sbr.rel (%p174) target = $region36
        $region35: #{tpu_custom_call.1} parent=27 // pred_region
          %178 = dma.done %s170, 128
        $region36: #{tpu_custom_call.1} parent=27 // pred_fallthru
          _
        %s179 = sand.u32 %s30, 1
        %s180 = scalar_lea.sflag [#allocation3], %s179
        %s181 = sand.u32 %s30, 1
        %s182 = smul.addr %s181, 8
        %s183 = scalar_lea.vmem [#allocation2], %s182
        %p184 = pneg %p43
        %p185 = pneg %p40
        %s186 = sand.u32 %s56, 1
        %s187 = scalar_lea.sflag [#allocation6], %s186
        %s188 = sand.u32 %s56, 1
        %s189 = smul.addr %s188, 8
        %s190 = scalar_lea.vmem [#allocation5], %s189
        %p191 = pneg %p69
        %p192 = pneg %p66
        %p193 = pneg %p95
        %p194 = pneg %p92
        %s195 = sand.u32 %s82, 1
        %s196 = scalar_lea.sflag [#allocation4], %s195
        %s197 = sand.u32 %s82, 1
        %s198 = smul.addr %s197, 8
        %s199 = scalar_lea.vmem [#allocation7], %s198
        %v200 = vld [vmem:[%s163] sm:$0xff]
        %v201 = vld [vmem:[%s173] sm:$0xff]
        %v202 = vmul.f32 %v201, 0.3
        %v203 = vadd.f32 %v200, %v202
        %vm204 = vcmask 261120
        %v205 = vsel %vm204, %v203, 0.0
        %206 = vadd.xlane.f32.xlu0 %v205
        %v207 = vpop.xlane.xlu0 %206
        %v208 = vmul.f32 %v207, 0.03125
        %v209 = vsub.f32 %v203, %v208
        %v210 = vmul.f32 %v209, %v209
        %v211 = vsel %vm204, %v210, 0.0
        %212 = vadd.xlane.f32.xlu0 %v211
        %v213 = vpop.xlane.xlu0 %212
        %v214 = vmul.f32 %v213, 0.032258064
        %v215 = vrsqrt.pop %v214
        %v216 = vmul.f32 %v215, %v214
        %v217 = vmul.f32 %v216, %v215
        %v218 = vmul.f32 0.5, %v217
        %v219 = vsub.f32 1.5, %v218
        %v220 = vmul.f32 %v215, %v219
        %v221 = vmul.f32 %v214, %v220
        %vm222 = vcmp.eq.f32.partialorder %v214, inf
        %v223 = vsel %vm222, %v214, %v221
        %vm224 = vcmp.eq.f32.partialorder %v214, 0.0
        %v225 = vand.u32 %v214, 2147483648
        %v226 = vsel %vm224, %v225, %v223
        %v227 = vadd.f32 %v226, 1e-06
        %v228 = vrcp.pop %v227
        %v229 = vmul.f32 %v227, %v228
        %v230 = vsub.f32 1.0, %v229
        %v231 = vmul.f32 %v228, %v230
        %v232 = vadd.f32 %v228, %v231
        %vm233 = vweird.f32 %v227
        %vm234 = vweird.f32 %v228
        %vm235 = vmor %vm233, %vm234
        %v236 = vsel %vm235, %v228, %v232
        %v237 = vand.u32 2147483647, %v227
        %vm238 = vcmp.eq.f32.partialorder %v237, 8.507059e+37
        %v239 = vand.u32 %v227, 2147483648
        %v240 = vor.u32 1.1754944e-38, %v239
        %v241 = vsel %vm238, %v240, %v236
        %v242 = vmul.f32 %v209, %v241
        %v243 = vadd.f32 %v242, 0.0
        %244 = vst.msk [vmem:[%s199] sm:$0xff] %vm204, %v243
        %s245 = sand.u32 %s82, 1
        %s246 = scalar_lea.sflag [#allocation4], %s245
        %s247 = sand.u32 %s82, 1
        %s248 = smul.addr %s247, 8
        %s249 = scalar_lea.vmem [#allocation7], %s248
        // Predicated region
        $region37: #{tpu_custom_call.1} parent=27 // pred_check
          %p250 = pneg %p92
        $region38: #{tpu_custom_call.1} parent=27 // pred_check_branch
          %252 = sbr.rel (%p250) target = $region40
        $region39: #{tpu_custom_call.1} parent=27 // pred_region
          %254 = vsyncadd %s246, 0
          %s255 = smul.addr %s22, 8
          %s256 = scalar_lea.hbm %s2, %s255
          %s258 = sshll.u32 %s249, 4
          %s259 = int_to_ptr.vmem [resolvable:$true] %s258
          %s260 = sshll.u32 %s256, 4
          %s261 = int_to_ptr.hbm [resolvable:$true] %s260
          %263 = dma.vmem_to_hbm [thread:$0]  %s259, 128, %s261, %s246
        $region40: #{tpu_custom_call.1} parent=27 // pred_fallthru
          _
      $region28: #{tpu_custom_call.1} parent=5 // pred_fallthru
        _
      %p264 = scmp.le.s32.totalorder 2, %s17
      // Predicated region
      $region41: #{tpu_custom_call.1} parent=5 // pred_check
        %p265 = pneg %p264
      $region42: #{tpu_custom_call.1} parent=5 // pred_check_branch
        %267 = sbr.rel (%p265) target = $region44
      $region43: #{tpu_custom_call.1} parent=5 // pred_region
        %s268 = ssub.s32 %s17, 2
        // Predicated region
        $region45: #{tpu_custom_call.1} parent=43 // pred_check
          %p269 = pneg %p98
        $region46: #{tpu_custom_call.1} parent=43 // pred_check_branch
          %271 = sbr.rel (%p269) target = $region48
        $region47: #{tpu_custom_call.1} parent=43 // pred_region
          %s272 = sand.u32 %s83, 1
          %s273 = scalar_lea.sflag [#allocation4], %s272
          %s274 = sand.u32 %s83, 1
          %s275 = smul.addr %s274, 8
          %s276 = scalar_lea.vmem [#allocation7], %s275
          %278 = dma.done %s273, 128
        $region48: #{tpu_custom_call.1} parent=43 // pred_fallthru
          _
      $region44: #{tpu_custom_call.1} parent=5 // pred_fallthru
        _
    $region6: #{tpu_custom_call.1} parent=1 // loop_footer
      %s21 = sadd.s32 1, %s17
    $region7: #{tpu_custom_call.1} parent=1 // loop_footer_branch
      %16 = sbr.rel target = $region3
    $region8: #{tpu_custom_call.1} parent=1 // loop_exit
      _
    %279 = vsyncpa [#allocation3], 1
    %s280 = scalar_lea.sflag [#allocation3], 1
    %281 = vsyncpa %s280, 1
    %282 = vsyncpa [#allocation6], 1
    %s283 = scalar_lea.sflag [#allocation6], 1
    %284 = vsyncpa %s283, 1
    %285 = vsyncpa [#allocation4], 1
    %s286 = scalar_lea.sflag [#allocation4], 1
    %287 = vsyncpa %s286, 1

</llo_original>
